<compile_context>
chip_gen: v5e
topology: v5e:2x2
jax: 0.10.0
libtpu: 0.0.40
codegen_flags: <defaults>
</compile_context>

<pallas_src>
import math
import functools
import numpy as np
import jax
import jax.numpy as jnp
from jax import lax
from jax.experimental import pallas as pl
from jax.experimental.pallas import tpu as pltpu


# ----------------------------------------------------------------------------
# Deterministic projection-matrix construction (gaussian_orthogonal_random_matrix)
# ----------------------------------------------------------------------------
def _orthogonal_matrix_chunk(key, cols):
    block = jax.random.normal(key, (cols, cols), dtype=jnp.float32)
    q, _ = jnp.linalg.qr(block)
    return q.T


def gaussian_orthogonal_random_matrix(key, nb_rows, nb_columns, scaling=0):
    nb_full_blocks = nb_rows // nb_columns
    keys = jax.random.split(key, nb_full_blocks + 2)
    blocks = [_orthogonal_matrix_chunk(keys[i], nb_columns) for i in range(nb_full_blocks)]
    remaining = nb_rows - nb_full_blocks * nb_columns
    if remaining > 0:
        blocks.append(_orthogonal_matrix_chunk(keys[nb_full_blocks], nb_columns)[:remaining])
    mat = jnp.concatenate(blocks, axis=0)
    if scaling == 0:
        multiplier = jnp.linalg.norm(
            jax.random.normal(keys[-1], (nb_rows, nb_columns), dtype=jnp.float32), axis=1)
    elif scaling == 1:
        multiplier = math.sqrt(float(nb_columns)) * jnp.ones((nb_rows,), dtype=jnp.float32)
    else:
        raise ValueError(f"{scaling} != 0, 1")
    return jnp.diag(multiplier) @ mat  # (nb_rows, nb_columns)


# ----------------------------------------------------------------------------
# Pass 1: accumulate context = k'^T @ v and k_sum = sum_n k' over sequence tiles.
# grid = (b*h, n // TN); second axis is the reduction ("arbitrary").
# ----------------------------------------------------------------------------
def _kv_context_kernel(projT_ref, k_ref, v_ref, ctx_ref, ksum_ref, *, half_nsq, eps):
    t = pl.program_id(1)

    @pl.when(t == 0)
    def _init():
        ctx_ref[...] = jnp.zeros_like(ctx_ref)
        ksum_ref[...] = jnp.zeros_like(ksum_ref)

    k = k_ref[0]                 # (TN, d) f32
    v = v_ref[0]                 # (TN, d) f32
    projT = projT_ref[...]       # (d, m) bf16, already scaled by d**-0.25

    # k_dash = (normalizer * k) @ proj^T   (normalizer folded into projT)
    k_dash = jnp.dot(k.astype(jnp.bfloat16), projT,
                     preferred_element_type=jnp.float32)           # (TN, m) f32
    k_diag = jnp.sum(k * k, axis=-1, keepdims=True) * half_nsq     # (TN, 1)
    # key feature map (module semantics: eps inside the exp, no max subtraction)
    k_prime = jnp.exp(k_dash - k_diag + eps)                       # (TN, m) f32

    # context += k'^T @ v : contract the sequence axis directly (no transpose)
    ctx_ref[0] += lax.dot_general(
        k_prime.astype(jnp.bfloat16), v.astype(jnp.bfloat16),
        dimension_numbers=(((0,), (0,)), ((), ())),
        preferred_element_type=jnp.float32)                        # (m, d)
    ksum_ref[0] += jnp.sum(k_prime, axis=0, keepdims=True)         # (1, m)


# ----------------------------------------------------------------------------
# Pass 2: apply.  out = (q' @ context) * 1/(q' . k_sum + eps')
# grid = (b*h, n // TN); both axes parallel.
# ----------------------------------------------------------------------------
def _apply_kernel(projT_ref, q_ref, ctx_ref, ksum_ref, o_ref, *,
                  half_nsq, eps, denom_eps):
    q = q_ref[0]                 # (TN, d) f32
    projT = projT_ref[...]       # (d, m) bf16
    ctx = ctx_ref[0]             # (m, d) f32
    ksum = ksum_ref[0]           # (1, m) f32

    q_dash = jnp.dot(q.astype(jnp.bfloat16), projT,
                     preferred_element_type=jnp.float32)           # (TN, m)
    q_diag = jnp.sum(q * q, axis=-1, keepdims=True) * half_nsq     # (TN, 1)
    q_max = jnp.max(q_dash, axis=-1, keepdims=True)                # (TN, 1)
    # query feature map (eps outside the exp), m**-0.5 ratio dropped (cancels)
    q_prime = jnp.exp(q_dash - q_diag - q_max) + eps               # (TN, m) f32

    # denominator on the VPU (broadcast multiply + lane reduce), EUP reciprocal
    denom = jnp.sum(q_prime * ksum, axis=-1, keepdims=True) + denom_eps  # (TN, 1)
    inv = pl.reciprocal(denom, approx=True)

    out = jnp.dot(q_prime.astype(jnp.bfloat16), ctx.astype(jnp.bfloat16),
                  preferred_element_type=jnp.float32) * inv        # (TN, d)
    o_ref[0] = out.astype(o_ref.dtype)


def _choose_seq_tile(n, target=512):
    """Largest multiple-of-8 divisor of n not exceeding `target` (else n)."""
    if n <= target:
        return n
    for cand in range(target, 7, -8):
        if n % cand == 0:
            return cand
    return n


def fast_attention(q, k, v, projection_matrix, *, seq_tile=512):
    """q, k, v: (b, h, n, d) float32; projection_matrix: (m, d) float32."""
    b, h, n, d = q.shape
    m = projection_matrix.shape[0]
    bh = b * h

    qf = q.reshape(bh, n, d)
    kf = k.reshape(bh, n, d)
    vf = v.reshape(bh, n, d)

    # Fold the d**-0.25 data normalizer into the projection; ship it as bf16
    # (MXU-native input, half the HBM traffic).
    d_normalizer = float(d) ** (-0.25)
    projT = (jnp.asarray(projection_matrix, jnp.float32).T * d_normalizer
             ).astype(jnp.bfloat16)                                # (d, m)

    tn = _choose_seq_tile(n, seq_tile)
    n_tiles = n // tn

    half_nsq = 0.5 * float(d) ** (-0.5)      # 0.5 * normalizer**2
    eps = 1e-4
    denom_eps = 1e-8 * float(m)              # 1e-8 / ratio**2 (ratio = m**-0.5)

    vmem_limit = 32 * 1024 * 1024            # safe on v5e/v6e/v7x for these tiles

    kv_kernel = functools.partial(_kv_context_kernel, half_nsq=half_nsq, eps=eps)
    apply_kernel = functools.partial(_apply_kernel, half_nsq=half_nsq, eps=eps,
                                     denom_eps=denom_eps)

    # --- pass 1: context / k_sum reduction over sequence tiles ---------------
    ctx, ksum = pl.pallas_call(
        kv_kernel,
        out_shape=(jax.ShapeDtypeStruct((bh, m, d), jnp.float32),
                   jax.ShapeDtypeStruct((bh, 1, m), jnp.float32)),
        grid_spec=pltpu.PrefetchScalarGridSpec(
            num_scalar_prefetch=0,
            grid=(bh, n_tiles),
            in_specs=[
                pl.BlockSpec((d, m), lambda i, t: (0, 0)),         # shared projection
                pl.BlockSpec((1, tn, d), lambda i, t: (i, t, 0)),  # k tile
                pl.BlockSpec((1, tn, d), lambda i, t: (i, t, 0)),  # v tile
            ],
            out_specs=[
                pl.BlockSpec((1, m, d), lambda i, t: (i, 0, 0)),   # context (resident)
                pl.BlockSpec((1, 1, m), lambda i, t: (i, 0, 0)),   # k_sum   (resident)
            ],
        ),
        compiler_params=pltpu.CompilerParams(
            dimension_semantics=("parallel", "arbitrary"),
            vmem_limit_bytes=vmem_limit),
    )(projT, kf, vf)

    # --- pass 2: stream q tiles and apply -----------------------------------
    out = pl.pallas_call(
        apply_kernel,
        out_shape=jax.ShapeDtypeStruct((bh, n, d), q.dtype),
        grid_spec=pltpu.PrefetchScalarGridSpec(
            num_scalar_prefetch=0,
            grid=(bh, n_tiles),
            in_specs=[
                pl.BlockSpec((d, m), lambda i, t: (0, 0)),         # shared projection
                pl.BlockSpec((1, tn, d), lambda i, t: (i, t, 0)),  # q tile
                pl.BlockSpec((1, m, d), lambda i, t: (i, 0, 0)),   # context
                pl.BlockSpec((1, 1, m), lambda i, t: (i, 0, 0)),   # k_sum
            ],
            out_specs=pl.BlockSpec((1, tn, d), lambda i, t: (i, t, 0)),
        ),
        compiler_params=pltpu.CompilerParams(
            dimension_semantics=("parallel", "parallel"),
            vmem_limit_bytes=vmem_limit),
    )(projT, qf, ctx, ksum)

    return out.reshape(b, h, n, d)


# ----------------------------------------------------------------------------
# Plain-JAX reference (mirrors the PyTorch forward) for a sanity check.
# ----------------------------------------------------------------------------
def fast_attention_ref(q, k, v, proj):
    d = q.shape[-1]
    m = proj.shape[0]
    normalizer = float(d) ** (-0.25)
    ratio = float(m) ** (-0.5)
    eps = 1e-4

    def feats(data, is_query):
        dash = jnp.einsum('bhid,jd->bhij', normalizer * data, proj)
        diag = (jnp.sum(data ** 2, axis=-1) / 2.0 * normalizer ** 2)[..., None]
        if is_query:
            return ratio * (jnp.exp(dash - diag - jnp.max(dash, axis=-1, keepdims=True)) + eps)
        return ratio * jnp.exp(dash - diag + eps)

    qp = feats(q, True)
    kp = feats(k, False)
    context = jnp.einsum('bhnd,bhne->bhde', kp, v)
    d_inv = 1.0 / (jnp.einsum('bhnd,bhd->bhn', qp, kp.sum(axis=-2)) + 1e-8)
    return jnp.einsum('bhde,bhnd,bhn->bhne', context, qp, d_inv)


if __name__ == "__main__":
    key = jax.random.PRNGKey(0)
    b, h, n, dim_heads, nb_features = 2, 4, 16, 16, 128

    k_proj, k_q, k_k, k_v = jax.random.split(key, 4)
    projection_matrix = gaussian_orthogonal_random_matrix(
        k_proj, nb_rows=nb_features, nb_columns=dim_heads, scaling=0)

    q = jax.random.normal(k_q, (b, h, n, dim_heads), dtype=jnp.float32)
    k = jax.random.normal(k_k, (b, h, n, dim_heads), dtype=jnp.float32)
    v = jax.random.normal(k_v, (b, h, n, dim_heads), dtype=jnp.float32)

    # seq_tile=8 forces n//TN = 2 tiles so the reduction/accumulation path is
    # exercised even at this small test size.
    out = fast_attention(q, k, v, projection_matrix, seq_tile=8)
    out = jax.block_until_ready(out)

    ref = jax.block_until_ready(fast_attention_ref(q, k, v, projection_matrix))
    np.testing.assert_allclose(np.asarray(out), np.asarray(ref), rtol=5e-2, atol=5e-2)

    print("KERNEL_OK")
</pallas_src>

<mosaic_0001>
module attributes {stable_mosaic.version = 11 : i64} {
  func.func @_kv_context_kernel(%arg0: i32, %arg1: i32, %arg2: memref<16x128xbf16, #tpu.memory_space<vmem>>, %arg3: memref<1x8x16xf32, #tpu.memory_space<vmem>>, %arg4: memref<1x8x16xf32, #tpu.memory_space<vmem>>, %arg5: memref<1x128x16xf32, #tpu.memory_space<vmem>>, %arg6: memref<1x1x128xf32, #tpu.memory_space<vmem>>) attributes {dimension_semantics = [#tpu.dimension_semantics<parallel>, #tpu.dimension_semantics<arbitrary>], iteration_bounds = array<i64: 8, 2>, scalar_prefetch = 0 : i64, scratch_operands = 0 : i64, tpu.core_type = #tpu.core_type<tc>, window_params = [{pipeline_mode = #tpu.pipeline_mode<synchronous>, transform_indices = @transform_0, window_bounds = array<i64: 16, 128>}, {transform_indices = @transform_1, window_bounds = array<i64: 1, 8, 16>}, {transform_indices = @transform_2, window_bounds = array<i64: 1, 8, 16>}, {transform_indices = @transform_3, window_bounds = array<i64: 1, 128, 16>}, {transform_indices = @transform_4, window_bounds = array<i64: 1, 1, 128>}]} {
    %c0_i32 = arith.constant 0 : i32
    %0 = arith.cmpi eq, %arg1, %c0_i32 : i32
    %1 = arith.extui %0 : i1 to i32
    %c0_i32_0 = arith.constant 0 : i32
    %2 = arith.cmpi ne, %1, %c0_i32_0 : i32
    scf.if %2 {
      %cst_25 = arith.constant 0.000000e+00 : f32
      %37 = vector.broadcast %cst_25 : f32 to vector<1x128x16xf32>
      %c0_26 = arith.constant 0 : index
      %c0_27 = arith.constant 0 : index
      %c0_28 = arith.constant 0 : index
      %38 = vector.load %arg5[%c0_26, %c0_27, %c0_28] : memref<1x128x16xf32, #tpu.memory_space<vmem>>, vector<1x128x16xf32>
      tpu.vector_store %arg5[%c0_26, %c0_27, %c0_28], %37 {strides = array<i32>} : memref<1x128x16xf32, #tpu.memory_space<vmem>>, vector<1x128x16xf32>,
      %cst_29 = arith.constant 0.000000e+00 : f32
      %39 = vector.broadcast %cst_29 : f32 to vector<1x1x128xf32>
      %c0_30 = arith.constant 0 : index
      %c0_31 = arith.constant 0 : index
      %c0_32 = arith.constant 0 : index
      %40 = vector.load %arg6[%c0_30, %c0_31, %c0_32] : memref<1x1x128xf32, #tpu.memory_space<vmem>>, vector<1x1x128xf32>
      tpu.vector_store %arg6[%c0_30, %c0_31, %c0_32], %39 {strides = array<i32>} : memref<1x1x128xf32, #tpu.memory_space<vmem>>, vector<1x1x128xf32>,
    } else {
    }
    %c0 = arith.constant 0 : index
    %c0_1 = arith.constant 0 : index
    %c0_2 = arith.constant 0 : index
    %3 = vector.load %arg3[%c0, %c0_1, %c0_2] : memref<1x8x16xf32, #tpu.memory_space<vmem>>, vector<1x8x16xf32>
    %4 = vector.shape_cast %3 : vector<1x8x16xf32> to vector<8x16xf32>
    %c0_3 = arith.constant 0 : index
    %c0_4 = arith.constant 0 : index
    %c0_5 = arith.constant 0 : index
    %5 = vector.load %arg4[%c0_3, %c0_4, %c0_5] : memref<1x8x16xf32, #tpu.memory_space<vmem>>, vector<1x8x16xf32>
    %6 = vector.shape_cast %5 : vector<1x8x16xf32> to vector<8x16xf32>
    %c0_6 = arith.constant 0 : index
    %c0_7 = arith.constant 0 : index
    %7 = vector.load %arg2[%c0_6, %c0_7] : memref<16x128xbf16, #tpu.memory_space<vmem>>, vector<16x128xbf16>
    %8 = arith.truncf %4 : vector<8x16xf32> to vector<8x16xbf16>
    %cst = arith.constant dense<0.000000e+00> : vector<8x128xf32>
    %9 = tpu.matmul %8, %7, %cst {dimension_numbers = #tpu.dot_dimension_numbers<[1], [0], [0], [1], [0, 0, 1, 1], [], []>} : vector<8x16xbf16>, vector<16x128xbf16>, vector<8x128xf32> -> vector<8x128xf32>
    %10 = arith.mulf %4, %4 : vector<8x16xf32>
    %cst_8 = arith.constant dense<0.000000e+00> : vector<8xf32>
    %11 = vector.multi_reduction <add>, %10, %cst_8 [1] : vector<8x16xf32> to vector<8xf32>
    %12 = vector.shape_cast %11 : vector<8xf32> to vector<8x1xf32>
    %cst_9 = arith.constant 1.250000e-01 : f32
    %13 = vector.broadcast %cst_9 : f32 to vector<8x1xf32>
    %14 = arith.mulf %12, %13 : vector<8x1xf32>
    %15 = vector.broadcast %14 : vector<8x1xf32> to vector<8x128xf32>
    %16 = arith.subf %9, %15 : vector<8x128xf32>
    %cst_10 = arith.constant 9.99999974E-5 : f32
    %17 = vector.broadcast %cst_10 : f32 to vector<8x128xf32>
    %18 = arith.addf %16, %17 : vector<8x128xf32>
    %19 = math.exp %18 : vector<8x128xf32>
    %c0_11 = arith.constant 0 : index
    %c0_12 = arith.constant 0 : index
    %c0_13 = arith.constant 0 : index
    %20 = vector.load %arg5[%c0_11, %c0_12, %c0_13] : memref<1x128x16xf32, #tpu.memory_space<vmem>>, vector<1x128x16xf32>
    %21 = vector.shape_cast %20 : vector<1x128x16xf32> to vector<128x16xf32>
    %22 = arith.truncf %19 : vector<8x128xf32> to vector<8x128xbf16>
    %23 = arith.truncf %6 : vector<8x16xf32> to vector<8x16xbf16>
    %cst_14 = arith.constant dense<0.000000e+00> : vector<128x16xf32>
    %24 = tpu.matmul %22, %23, %cst_14 {dimension_numbers = #tpu.dot_dimension_numbers<[0], [0], [1], [1], [0, 1, 1, 1], [], []>} : vector<8x128xbf16>, vector<8x16xbf16>, vector<128x16xf32> -> vector<128x16xf32>
    %25 = arith.addf %21, %24 : vector<128x16xf32>
    %c0_15 = arith.constant 0 : index
    %c0_16 = arith.constant 0 : index
    %c0_17 = arith.constant 0 : index
    %26 = vector.load %arg5[%c0_15, %c0_16, %c0_17] : memref<1x128x16xf32, #tpu.memory_space<vmem>>, vector<1x128x16xf32>
    %27 = vector.shape_cast %26 : vector<1x128x16xf32> to vector<128x16xf32>
    %28 = vector.shape_cast %25 : vector<128x16xf32> to vector<1x128x16xf32>
    tpu.vector_store %arg5[%c0_15, %c0_16, %c0_17], %28 {strides = array<i32>} : memref<1x128x16xf32, #tpu.memory_space<vmem>>, vector<1x128x16xf32>,
    %c0_18 = arith.constant 0 : index
    %c0_19 = arith.constant 0 : index
    %c0_20 = arith.constant 0 : index
    %29 = vector.load %arg6[%c0_18, %c0_19, %c0_20] : memref<1x1x128xf32, #tpu.memory_space<vmem>>, vector<1x1x128xf32>
    %30 = vector.shape_cast %29 : vector<1x1x128xf32> to vector<1x128xf32>
    %cst_21 = arith.constant dense<0.000000e+00> : vector<128xf32>
    %31 = vector.multi_reduction <add>, %19, %cst_21 [0] : vector<8x128xf32> to vector<128xf32>
    %32 = vector.shape_cast %31 : vector<128xf32> to vector<1x128xf32>
    %33 = arith.addf %30, %32 : vector<1x128xf32>
    %c0_22 = arith.constant 0 : index
    %c0_23 = arith.constant 0 : index
    %c0_24 = arith.constant 0 : index
    %34 = vector.load %arg6[%c0_22, %c0_23, %c0_24] : memref<1x1x128xf32, #tpu.memory_space<vmem>>, vector<1x1x128xf32>
    %35 = vector.shape_cast %34 : vector<1x1x128xf32> to vector<1x128xf32>
    %36 = vector.shape_cast %33 : vector<1x128xf32> to vector<1x1x128xf32>
    tpu.vector_store %arg6[%c0_22, %c0_23, %c0_24], %36 {strides = array<i32>} : memref<1x1x128xf32, #tpu.memory_space<vmem>>, vector<1x1x128xf32>,
    return
  }
  func.func @transform_0(%arg0: i32, %arg1: i32) -> (i32, i32) {
    %c0_i32 = arith.constant 0 : i32
    %c0_i32_0 = arith.constant 0 : i32
    %c0_i32_1 = arith.constant 0 : i32
    return %c0_i32, %c0_i32_0 : i32, i32
  }
  func.func @transform_1(%arg0: i32, %arg1: i32) -> (i32, i32, i32) {
    %c0_i32 = arith.constant 0 : i32
    %c0_i32_0 = arith.constant 0 : i32
    return %arg0, %arg1, %c0_i32 : i32, i32, i32
  }
  func.func @transform_2(%arg0: i32, %arg1: i32) -> (i32, i32, i32) {
    %c0_i32 = arith.constant 0 : i32
    %c0_i32_0 = arith.constant 0 : i32
    return %arg0, %arg1, %c0_i32 : i32, i32, i32
  }
  func.func @transform_3(%arg0: i32, %arg1: i32) -> (i32, i32, i32) {
    %c0_i32 = arith.constant 0 : i32
    %c0_i32_0 = arith.constant 0 : i32
    %c0_i32_1 = arith.constant 0 : i32
    return %arg0, %c0_i32, %c0_i32_0 : i32, i32, i32
  }
  func.func @transform_4(%arg0: i32, %arg1: i32) -> (i32, i32, i32) {
    %c0_i32 = arith.constant 0 : i32
    %c0_i32_0 = arith.constant 0 : i32
    %c0_i32_1 = arith.constant 0 : i32
    return %arg0, %c0_i32, %c0_i32_0 : i32, i32, i32
  }
}

</mosaic_0001>

<llo_original>
// kernel: tpu_custom_call.1
$region0: #{tpu_custom_call.1}
  #allocation0 [shape = 'u32[]', space=smem, size = 0x4, offset = 0x4, fixed_abs, tag = 'smem constant byte address 0x4 - core index']
  #allocation1 [shape = 'u32[72,128]{1,0:T(1,128)}', space=vmem, size = 0x9000, scoped, tag = 'internal scratch']
  %s0 = inlined_call_operand.hbm [shape: bf16[16,128], index: 0, kind: input, shape index: {}]
  %s1 = inlined_call_operand.hbm [shape: f32[8,16,16], index: 1, kind: input, shape index: {}]
  %s2 = inlined_call_operand.hbm [shape: f32[8,16,16], index: 2, kind: input, shape index: {}]
  %s3 = inlined_call_operand.vmem [shape: f32[8,128,16], index: 3, kind: output, shape index: {0}]
  %s4 = inlined_call_operand.hbm [shape: f32[8,1,128], index: 4, kind: output, shape index: {1}]
  %5 = xla_tuple %s3, %s4
  %s6 = sld [smem:[#allocation0]]
  $region69: #{tpu_custom_call.1} parent=0
    _
  %s8 = ssub.s32 1, %s6
  %s9 = scalar_select 0, %s8, %s6
  $region1: #{tpu_custom_call.1} parent=0
    #allocation2 [shape = 'u8[4096]{0}', space=vmem, size = 0x1000, scoped, tag = 'input window, operand 0, single buffered']
    #allocation3 [shape = 's32[2]{0}', space=sflag, size = 0x8, scoped, tag = 'scoped memory for tpu_custom_call.1']
    #allocation4 [shape = 's32[2]{0}', space=sflag, size = 0x8, scoped, tag = 'scoped memory for tpu_custom_call.1']
    #allocation5 [shape = 'u8[8192]{0}', space=vmem, size = 0x2000, scoped, tag = 'input window, operand 1']
    #allocation6 [shape = 's32[2]{0}', space=sflag, size = 0x8, scoped, tag = 'scoped memory for tpu_custom_call.1']
    #allocation7 [shape = 'u8[8192]{0}', space=vmem, size = 0x2000, scoped, tag = 'input window, operand 2']
    #allocation8 [shape = 'u8[1024]{0}', space=vmem, size = 0x400, scoped, tag = 'output window, operand 1']
    %10 = vsyncpa [#allocation3], 0
    %11 = vsyncpa [#allocation6], 0
    %s12 = scalar_lea.sflag [#allocation6], 1
    %13 = vsyncpa %s12, 0
    %14 = vsyncpa [#allocation4], 0
    %s15 = scalar_lea.sflag [#allocation4], 1
    %16 = vsyncpa %s15, 0
    loop: start=0, step=1, limit=18
    $region2: #{tpu_custom_call.1} parent=1 // loop_pre_header
      _
    $region3: #{tpu_custom_call.1} parent=1 // loop_header
      %s18 = sphi 0, %s22
      %p19 = scmp.ge.s32.totalorder %s18, 18
      %s25 = sphi 0, %s37
      %s26 = sphi 0, %s33
      %s27 = sphi 0, %s25
      %s28 = sphi 0, %s26
      %s29 = sphi 0, %s27
      %s30 = sphi 0, %s28
      %s38 = sphi 0, %s38
      %s40 = sphi 0, %s38
      %s41 = sphi 0, %s40
      %s55 = sphi 0, %s41
      %s63 = sphi 0, %s65
      %s66 = sphi 0, %s63
      %s67 = sphi 0, %s66
      %s83 = sphi 0, %s67
      %s91 = sphi 0, %s93
      %s94 = sphi 0, %s91
      %s95 = sphi 0, %s94
      %s111 = sphi 0, %s95
      %s117 = sphi 0, %s119
      %s120 = sphi 0, %s117
      %s121 = sphi 0, %s120
      %s137 = sphi 0, %s121
      %s143 = sphi 0, %s145
      %s146 = sphi 0, %s143
      %s147 = sphi 0, %s146
      %s163 = sphi 0, %s147
    $region4: #{tpu_custom_call.1} parent=1 // loop_header_branch
      %21 = sbr.rel (%p19) target = $region8
    $region5: #{tpu_custom_call.1} parent=1 // loop_body
      %s23 = ssub.s32 %s18, 1
      %s24 = ssub.s32 %s18, 2
      %s31 = sadd.s32 1, %s26
      %p32 = scmp.ge.s32.totalorder %s31, 2
      %s33 = scalar_select %p32, 0, %s31
      %s34 = sadd.s32 1, %s25
      %s35 = scalar_select %p32, %s34, %s25
      %p36 = scmp.ge.s32.totalorder %s35, 8
      %s37 = scalar_select %p36, 0, %s35
      %s39 = sadd.s32 %s38, 1
      %p42 = scmp.eq.s32.totalorder %s18, 15
      %p43 = scmp.ne.s32.totalorder %s38, %s40
      %p44 = scmp.eq.s32.totalorder %s18, 0
      %p45 = por %p43, %p44
      %p46 = scmp.ne.s32.totalorder %s38, %s40
      %p47 = scmp.eq.s32.totalorder %s23, 15
      %p48 = por %p46, %p47
      %p49 = scmp.ne.s32.totalorder %s40, %s41
      %p50 = scmp.eq.s32.totalorder %s23, 0
      %p51 = por %p49, %p50
      %p52 = scmp.ne.s32.totalorder %s40, %s41
      %p53 = scmp.eq.s32.totalorder %s24, 15
      %p54 = por %p52, %p53
      %p56 = scmp.ne.s32.totalorder %s41, %s55
      %p57 = scmp.eq.s32.totalorder %s24, 0
      %p58 = por %p56, %p57
      %s59 = ssub.s32 %s25, %s37
      %s60 = ssub.s32 %s26, %s33
      %s61 = sor.u32 %s59, %s60
      %p62 = scmp.eq.s32.totalorder %s61, 0
      %s64 = sadd.s32 %s63, 1
      %s65 = scalar_select %p62, %s63, %s64
      %p68 = pneg %p62
      %p69 = scmp.eq.s32.totalorder %s18, 15
      %p70 = por %p68, %p69
      %p71 = scmp.ne.s32.totalorder %s63, %s66
      %p72 = scmp.eq.s32.totalorder %s18, 0
      %p73 = por %p71, %p72
      %p74 = scmp.ne.s32.totalorder %s63, %s66
      %p75 = scmp.eq.s32.totalorder %s23, 15
      %p76 = por %p74, %p75
      %p77 = scmp.ne.s32.totalorder %s66, %s67
      %p78 = scmp.eq.s32.totalorder %s23, 0
      %p79 = por %p77, %p78
      %p80 = scmp.ne.s32.totalorder %s66, %s67
      %p81 = scmp.eq.s32.totalorder %s24, 15
      %p82 = por %p80, %p81
      %p84 = scmp.ne.s32.totalorder %s67, %s83
      %p85 = scmp.eq.s32.totalorder %s24, 0
      %p86 = por %p84, %p85
      %s87 = ssub.s32 %s25, %s37
      %s88 = ssub.s32 %s26, %s33
      %s89 = sor.u32 %s87, %s88
      %p90 = scmp.eq.s32.totalorder %s89, 0
      %s92 = sadd.s32 %s91, 1
      %s93 = scalar_select %p90, %s91, %s92
      %p96 = pneg %p90
      %p97 = scmp.eq.s32.totalorder %s18, 15
      %p98 = por %p96, %p97
      %p99 = scmp.ne.s32.totalorder %s91, %s94
      %p100 = scmp.eq.s32.totalorder %s18, 0
      %p101 = por %p99, %p100
      %p102 = scmp.ne.s32.totalorder %s91, %s94
      %p103 = scmp.eq.s32.totalorder %s23, 15
      %p104 = por %p102, %p103
      %p105 = scmp.ne.s32.totalorder %s94, %s95
      %p106 = scmp.eq.s32.totalorder %s23, 0
      %p107 = por %p105, %p106
      %p108 = scmp.ne.s32.totalorder %s94, %s95
      %p109 = scmp.eq.s32.totalorder %s24, 15
      %p110 = por %p108, %p109
      %p112 = scmp.ne.s32.totalorder %s95, %s111
      %p113 = scmp.eq.s32.totalorder %s24, 0
      %p114 = por %p112, %p113
      %s115 = ssub.s32 %s25, %s37
      %p116 = scmp.eq.s32.totalorder %s115, 0
      %s118 = sadd.s32 %s117, 1
      %s119 = scalar_select %p116, %s117, %s118
      %p122 = pneg %p116
      %p123 = scmp.eq.s32.totalorder %s18, 15
      %p124 = por %p122, %p123
      %p125 = scmp.ne.s32.totalorder %s117, %s120
      %p126 = scmp.eq.s32.totalorder %s18, 0
      %p127 = por %p125, %p126
      %p128 = scmp.ne.s32.totalorder %s117, %s120
      %p129 = scmp.eq.s32.totalorder %s23, 15
      %p130 = por %p128, %p129
      %p131 = scmp.ne.s32.totalorder %s120, %s121
      %p132 = scmp.eq.s32.totalorder %s23, 0
      %p133 = por %p131, %p132
      %p134 = scmp.ne.s32.totalorder %s120, %s121
      %p135 = scmp.eq.s32.totalorder %s24, 15
      %p136 = por %p134, %p135
      %p138 = scmp.ne.s32.totalorder %s121, %s137
      %p139 = scmp.eq.s32.totalorder %s24, 0
      %p140 = por %p138, %p139
      %s141 = ssub.s32 %s25, %s37
      %p142 = scmp.eq.s32.totalorder %s141, 0
      %s144 = sadd.s32 %s143, 1
      %s145 = scalar_select %p142, %s143, %s144
      %p148 = pneg %p142
      %p149 = scmp.eq.s32.totalorder %s18, 15
      %p150 = por %p148, %p149
      %p151 = scmp.ne.s32.totalorder %s143, %s146
      %p152 = scmp.eq.s32.totalorder %s18, 0
      %p153 = por %p151, %p152
      %p154 = scmp.ne.s32.totalorder %s143, %s146
      %p155 = scmp.eq.s32.totalorder %s23, 15
      %p156 = por %p154, %p155
      %p157 = scmp.ne.s32.totalorder %s146, %s147
      %p158 = scmp.eq.s32.totalorder %s23, 0
      %p159 = por %p157, %p158
      %p160 = scmp.ne.s32.totalorder %s146, %s147
      %p161 = scmp.eq.s32.totalorder %s24, 15
      %p162 = por %p160, %p161
      %p164 = scmp.ne.s32.totalorder %s147, %s163
      %p165 = scmp.eq.s32.totalorder %s24, 0
      %p166 = por %p164, %p165
      %p167 = scmp.le.s32.totalorder 1, %s18
      %p168 = scmp.lt.s32.totalorder %s18, 17
      %p169 = pnand %p167, %p168
      %p170 = pneg %p169
      // Predicated region
      $region9: #{tpu_custom_call.1} parent=5 // pred_check
        _
      $region10: #{tpu_custom_call.1} parent=5 // pred_check_branch
        %172 = sbr.rel (%p169) target = $region12
      $region11: #{tpu_custom_call.1} parent=5 // pred_region
        %s173 = ssub.s32 %s18, 1
        // Predicated region
        $region13: #{tpu_custom_call.1} parent=11 // pred_check
          %p174 = pneg %p51
        $region14: #{tpu_custom_call.1} parent=11 // pred_check_branch
          %176 = sbr.rel (%p174) target = $region16
        $region15: #{tpu_custom_call.1} parent=11 // pred_region
          %178 = vsyncadd [#allocation3], 0
          %s179 = sshll.u32 %s0, 4
          %s180 = int_to_ptr.hbm [resolvable:$true] %s179
          %s181 = sshll.u32 [#allocation2], 4
          %s182 = int_to_ptr.vmem [resolvable:$true] %s181
          %187 = dma.hbm_to_vmem [thread:$0]  %s180, 128, %s182, [#allocation3], 64, 64, 4
        $region16: #{tpu_custom_call.1} parent=11 // pred_fallthru
          _
      $region12: #{tpu_custom_call.1} parent=5 // pred_fallthru
        _
      %p188 = scmp.lt.s32.totalorder %s18, 16
      // Predicated region
      $region17: #{tpu_custom_call.1} parent=5 // pred_check
        %p189 = pneg %p188
      $region18: #{tpu_custom_call.1} parent=5 // pred_check_branch
        %191 = sbr.rel (%p189) target = $region20
      $region19: #{tpu_custom_call.1} parent=5 // pred_region
        // Predicated region
        $region21: #{tpu_custom_call.1} parent=19 // pred_check
          %p192 = pneg %p73
        $region22: #{tpu_custom_call.1} parent=19 // pred_check_branch
          %194 = sbr.rel (%p192) target = $region24
        $region23: #{tpu_custom_call.1} parent=19 // pred_region
          %s195 = sand.u32 %s18, 1
          %s196 = scalar_lea.sflag [#allocation6], %s195
          %s197 = sand.u32 %s63, 1
          %s198 = smul.addr %s197, 8
          %s199 = scalar_lea.vmem [#allocation5], %s198
          %201 = vsyncadd %s196, 0
          %s202 = smul.addr %s25, 2
          %s203 = sadd.s32 %s26, %s202
          %s204 = smul.addr %s203, 8
          %s205 = scalar_lea.hbm %s1, %s204
          %s207 = sshll.u32 %s205, 4
          %s208 = int_to_ptr.hbm [resolvable:$true] %s207
          %s209 = sshll.u32 %s199, 4
          %s210 = int_to_ptr.vmem [resolvable:$true] %s209
          %212 = dma.hbm_to_vmem [thread:$0]  %s208, 128, %s210, %s196
        $region24: #{tpu_custom_call.1} parent=19 // pred_fallthru
          _
        // Predicated region
        $region25: #{tpu_custom_call.1} parent=19 // pred_check
          %p213 = pneg %p101
        $region26: #{tpu_custom_call.1} parent=19 // pred_check_branch
          %215 = sbr.rel (%p213) target = $region28
        $region27: #{tpu_custom_call.1} parent=19 // pred_region
          %s216 = sand.u32 %s18, 1
          %s217 = scalar_lea.sflag [#allocation6], %s216
          %s218 = sand.u32 %s91, 1
          %s219 = smul.addr %s218, 8
          %s220 = scalar_lea.vmem [#allocation7], %s219
          %222 = vsyncadd %s217, 0
          %s223 = smul.addr %s25, 2
          %s224 = sadd.s32 %s26, %s223
          %s225 = smul.addr %s224, 8
          %s226 = scalar_lea.hbm %s2, %s225
          %s228 = sshll.u32 %s226, 4
          %s229 = int_to_ptr.hbm [resolvable:$true] %s228
          %s230 = sshll.u32 %s220, 4
          %s231 = int_to_ptr.vmem [resolvable:$true] %s230
          %233 = dma.hbm_to_vmem [thread:$0]  %s229, 128, %s231, %s217
        $region28: #{tpu_custom_call.1} parent=19 // pred_fallthru
          _
      $region20: #{tpu_custom_call.1} parent=5 // pred_fallthru
        _
      %p234 = scmp.le.s32.totalorder 1, %s18
      %p235 = scmp.lt.s32.totalorder %s18, 17
      %p236 = pnand %p234, %p235
      %p237 = pneg %p236
      // Predicated region
      $region29: #{tpu_custom_call.1} parent=5 // pred_check
        _
      $region30: #{tpu_custom_call.1} parent=5 // pred_check_branch
        %239 = sbr.rel (%p236) target = $region32
      $region31: #{tpu_custom_call.1} parent=5 // pred_region
        %s240 = ssub.s32 %s18, 1
        // Predicated region
        $region33: #{tpu_custom_call.1} parent=31 // pred_check
          %p241 = pneg %p51
        $region34: #{tpu_custom_call.1} parent=31 // pred_check_branch
          %243 = sbr.rel (%p241) target = $region36
        $region35: #{tpu_custom_call.1} parent=31 // pred_region
          %245 = dma.done [#allocation3], 128
        $region36: #{tpu_custom_call.1} parent=31 // pred_fallthru
          _
        %s246 = sand.u32 %s23, 1
        %s247 = scalar_lea.sflag [#allocation6], %s246
        %s248 = sand.u32 %s66, 1
        %s249 = smul.addr %s248, 8
        %s250 = scalar_lea.vmem [#allocation5], %s249
        // Predicated region
        $region37: #{tpu_custom_call.1} parent=31 // pred_check
          %p251 = pneg %p79
        $region38: #{tpu_custom_call.1} parent=31 // pred_check_branch
          %253 = sbr.rel (%p251) target = $region40
        $region39: #{tpu_custom_call.1} parent=31 // pred_region
          %255 = dma.done %s247, 128
        $region40: #{tpu_custom_call.1} parent=31 // pred_fallthru
          _
        %s256 = sand.u32 %s23, 1
        %s257 = scalar_lea.sflag [#allocation6], %s256
        %s258 = sand.u32 %s94, 1
        %s259 = smul.addr %s258, 8
        %s260 = scalar_lea.vmem [#allocation7], %s259
        // Predicated region
        $region41: #{tpu_custom_call.1} parent=31 // pred_check
          %p261 = pneg %p107
        $region42: #{tpu_custom_call.1} parent=31 // pred_check_branch
          %263 = sbr.rel (%p261) target = $region44
        $region43: #{tpu_custom_call.1} parent=31 // pred_region
          %265 = dma.done %s257, 128
        $region44: #{tpu_custom_call.1} parent=31 // pred_fallthru
          _
        %p266 = pneg %p51
        %p267 = pneg %p48
        %s268 = sand.u32 %s23, 1
        %s269 = scalar_lea.sflag [#allocation6], %s268
        %s270 = sand.u32 %s66, 1
        %s271 = smul.addr %s270, 8
        %s272 = scalar_lea.vmem [#allocation5], %s271
        %p273 = pneg %p79
        %p274 = pneg %p76
        %s275 = sand.u32 %s23, 1
        %s276 = scalar_lea.sflag [#allocation6], %s275
        %s277 = sand.u32 %s94, 1
        %s278 = smul.addr %s277, 8
        %s279 = scalar_lea.vmem [#allocation7], %s278
        %p280 = pneg %p107
        %p281 = pneg %p104
        %p282 = pneg %p133
        %p283 = pneg %p130
        %p284 = scmp.lt.s32.totalorder %s27, 7
        %s285 = scalar_select %p284, %s27, 7
        %s286 = smul.addr %s285, 16
        %s287 = smul.addr %s286, 8
        %s288 = scalar_lea.vmem %s3, %s287
        %p289 = pneg %p159
        %p290 = pneg %p156
        %s291 = sand.u32 %s146, 1
        %s292 = scalar_lea.sflag [#allocation4], %s291
        %s293 = sand.u32 %s146, 1
        %s294 = scalar_lea.vmem [#allocation8], %s293
        %p295 = scmp.lt.s32.totalorder %s27, 7
        %s296 = scalar_select %p295, %s27, 7
        %s297 = smul.addr %s296, 16
        %s298 = smul.addr %s297, 8
        %s299 = scalar_lea.vmem %s3, %s298
        %p301 = scmp.eq.s32.totalorder %s28, 0
        // Predicated region
        $region45: #{tpu_custom_call.1} parent=31 // pred_check
          %p302 = pneg %p301
        $region46: #{tpu_custom_call.1} parent=31 // pred_check_branch
          %304 = sbr.rel (%p302) target = $region48
        $region47: #{tpu_custom_call.1} parent=31 // pred_region
          %vm305 = vcmask 130048
          %306 = vst.msk [vmem:[%s299] sm:$0xff] %vm305, 0.0
          %307 = vst.msk [vmem:[%s299 + $0x8] sm:$0xff] %vm305, 0.0
          %308 = vst.msk [vmem:[%s299 + $0x10] sm:$0xff] %vm305, 0.0
          %309 = vst.msk [vmem:[%s299 + $0x18] sm:$0xff] %vm305, 0.0
          %310 = vst.msk [vmem:[%s299 + $0x20] sm:$0xff] %vm305, 0.0
          %311 = vst.msk [vmem:[%s299 + $0x28] sm:$0xff] %vm305, 0.0
          %312 = vst.msk [vmem:[%s299 + $0x30] sm:$0xff] %vm305, 0.0
          %313 = vst.msk [vmem:[%s299 + $0x38] sm:$0xff] %vm305, 0.0
          %314 = vst.msk [vmem:[%s299 + $0x40] sm:$0xff] %vm305, 0.0
          %315 = vst.msk [vmem:[%s299 + $0x48] sm:$0xff] %vm305, 0.0
          %316 = vst.msk [vmem:[%s299 + $0x50] sm:$0xff] %vm305, 0.0
          %317 = vst.msk [vmem:[%s299 + $0x58] sm:$0xff] %vm305, 0.0
          %318 = vst.msk [vmem:[%s299 + $0x60] sm:$0xff] %vm305, 0.0
          %319 = vst.msk [vmem:[%s299 + $0x68] sm:$0xff] %vm305, 0.0
          %320 = vst.msk [vmem:[%s299 + $0x70] sm:$0xff] %vm305, 0.0
          %321 = vst.msk [vmem:[%s299 + $0x78] sm:$0xff] %vm305, 0.0
          %322 = vst [vmem:[%s294] sm:$0x1] 0.0
        $region48: #{tpu_custom_call.1} parent=31 // pred_fallthru
          _
        %v323 = vld [vmem:[%s250] sm:$0xff]
        %v324 = vld [vmem:[%s260] sm:$0xff]
        %v325 = vld [vmem:[#allocation2] sm:$0xf]
        %v326 = vld [vmem:[#allocation2 + $0x4] sm:$0xf]
        %v327 = vpack.c.bf16 %v323, %v323
        %v330 = vunpack.c.l.b16 %v325
        %v331 = vunpack.c.l.b16 %v326
        %v332 = vpack.c.b16 %v331, %v330
        %vm334 = vcmask 130048
        %v336 = vsel %vm334, %v327, 0
        %338 = vmatpush.bf16.msra.mxu0 0
        %339 = vmatpush.bf16.msra.mxu0 0
        %340 = vmatpush.bf16.msra.mxu0 0
        %341 = vmatpush.bf16.msra.mxu0 0
        %342 = vmatpush.bf16.msra.mxu0 0
        %343 = vmatpush.bf16.msra.mxu0 0
        %344 = vmatpush.bf16.msra.mxu0 0
        %345 = vmatpush.bf16.msra.mxu0 %v332
        %346 = vmatmul.bf16.gmra.mxu0 %v336
        %v347 = vpop.f32.mrf.mxu0
        %v348 = vadd.f32 0.0, %v347
        %v349 = vpop.f32.mrf.mxu0
        %350 = vdwg.mxu0
        %v351 = vmul.f32 %v323, %v323
        %v352 = vsel %vm334, %v351, 0.0
        %353 = vadd.xlane.f32.xlu0 %v352
        %v354 = vpop.xlane.xlu0 %353
        %v355 = vmul.f32 %v354, 0.125
        %v356 = vsub.f32 %v348, %v355
        %v357 = vadd.f32 %v356, 0.0001
        %v358 = vmul.f32 %v357, 1.442695
        %v359 = vpow.pop %v358
        %v360 = vld [vmem:[%s299] sm:$0xff]
        %v361 = vld [vmem:[%s299 + $0x8] sm:$0xff]
        %v362 = vld [vmem:[%s299 + $0x10] sm:$0xff]
        %v363 = vld [vmem:[%s299 + $0x18] sm:$0xff]
        %v364 = vld [vmem:[%s299 + $0x20] sm:$0xff]
        %v365 = vld [vmem:[%s299 + $0x28] sm:$0xff]
        %v366 = vld [vmem:[%s299 + $0x30] sm:$0xff]
        %v367 = vld [vmem:[%s299 + $0x38] sm:$0xff]
        %v368 = vld [vmem:[%s299 + $0x40] sm:$0xff]
        %v369 = vld [vmem:[%s299 + $0x48] sm:$0xff]
        %v370 = vld [vmem:[%s299 + $0x50] sm:$0xff]
        %v371 = vld [vmem:[%s299 + $0x58] sm:$0xff]
        %v372 = vld [vmem:[%s299 + $0x60] sm:$0xff]
        %v373 = vld [vmem:[%s299 + $0x68] sm:$0xff]
        %v374 = vld [vmem:[%s299 + $0x70] sm:$0xff]
        %v375 = vld [vmem:[%s299 + $0x78] sm:$0xff]
        %v376 = vpack.c.bf16 %v359, %v359
        %v377 = vpack.c.bf16 %v324, %v324
        %378 = vxpose.xlu0.c.b16.start [1/8] %v376, 128
        %379 = vxpose.xlu0.c.b16.cont [2/8] 0, 128
        %380 = vxpose.xlu0.c.b16.cont [3/8] 0, 128
        %381 = vxpose.xlu0.c.b16.cont [4/8] 0, 128
        %382 = vxpose.xlu0.c.b16.cont [5/8] 0, 128
        %383 = vxpose.xlu0.c.b16.cont [6/8] 0, 128
        %384 = vxpose.xlu0.c.b16.cont [7/8] 0, 128
        %385 = vxpose.xlu0.c.b16.end [8/8] 0, 128
        %v386 = vpop.trf.xlu0
        %v387 = vpop.trf.xlu0
        %v388 = vpop.trf.xlu0
        %v389 = vpop.trf.xlu0
        %v390 = vpop.trf.xlu0
        %v391 = vpop.trf.xlu0
        %v392 = vpop.trf.xlu0
        %v393 = vpop.trf.xlu0
        %vm394 = vcmask 64512
        %v396 = vsel %vm394, %v386, 0
        %v399 = vsel %vm394, %v387, 0
        %v402 = vsel %vm394, %v388, 0
        %v405 = vsel %vm394, %v389, 0
        %v408 = vsel %vm394, %v390, 0
        %v411 = vsel %vm394, %v391, 0
        %v414 = vsel %vm394, %v392, 0
        %v417 = vsel %vm394, %v393, 0
        %vm419 = vcmask 1043456
        %v421 = vsel %vm419, %v377, 0
        %423 = vmatpush.bf16.msra.mxu0 0
        %424 = vmatpush.bf16.msra.mxu0 0
        %425 = vmatpush.bf16.msra.mxu0 0
        %426 = vmatpush.bf16.msra.mxu0 0
        %427 = vmatpush.bf16.msra.mxu0 0
        %428 = vmatpush.bf16.msra.mxu0 0
        %429 = vmatpush.bf16.msra.mxu0 0
        %430 = vmatpush.bf16.msra.mxu0 %v421
        %431 = vmatmul.bf16.gmra.mxu0 %v396
        %v432 = vpop.f32.mrf.mxu0
        %v433 = vadd.f32 0.0, %v432
        %v434 = vpop.f32.mrf.mxu0
        %v435 = vadd.f32 0.0, %v434
        %436 = vmatmul.bf16.gmra.mxu0 %v399
        %v437 = vpop.f32.mrf.mxu0
        %v438 = vadd.f32 0.0, %v437
        %v439 = vpop.f32.mrf.mxu0
        %v440 = vadd.f32 0.0, %v439
        %441 = vmatmul.bf16.gmra.mxu0 %v402
        %v442 = vpop.f32.mrf.mxu0
        %v443 = vadd.f32 0.0, %v442
        %v444 = vpop.f32.mrf.mxu0
        %v445 = vadd.f32 0.0, %v444
        %446 = vmatmul.bf16.gmra.mxu0 %v405
        %v447 = vpop.f32.mrf.mxu0
        %v448 = vadd.f32 0.0, %v447
        %v449 = vpop.f32.mrf.mxu0
        %v450 = vadd.f32 0.0, %v449
        %451 = vmatmul.bf16.gmra.mxu0 %v408
        %v452 = vpop.f32.mrf.mxu0
        %v453 = vadd.f32 0.0, %v452
        %v454 = vpop.f32.mrf.mxu0
        %v455 = vadd.f32 0.0, %v454
        %456 = vmatmul.bf16.gmra.mxu0 %v411
        %v457 = vpop.f32.mrf.mxu0
        %v458 = vadd.f32 0.0, %v457
        %v459 = vpop.f32.mrf.mxu0
        %v460 = vadd.f32 0.0, %v459
        %461 = vmatmul.bf16.gmra.mxu0 %v414
        %v462 = vpop.f32.mrf.mxu0
        %v463 = vadd.f32 0.0, %v462
        %v464 = vpop.f32.mrf.mxu0
        %v465 = vadd.f32 0.0, %v464
        %466 = vmatmul.bf16.gmra.mxu0 %v417
        %v467 = vpop.f32.mrf.mxu0
        %v468 = vadd.f32 0.0, %v467
        %v469 = vpop.f32.mrf.mxu0
        %v470 = vadd.f32 0.0, %v469
        %471 = vdwg.mxu0
        %v472 = vadd.f32 %v360, %v433
        %v473 = vadd.f32 %v361, %v435
        %v474 = vadd.f32 %v362, %v438
        %v475 = vadd.f32 %v363, %v440
        %v476 = vadd.f32 %v364, %v443
        %v477 = vadd.f32 %v365, %v445
        %v478 = vadd.f32 %v366, %v448
        %v479 = vadd.f32 %v367, %v450
        %v480 = vadd.f32 %v368, %v453
        %v481 = vadd.f32 %v369, %v455
        %v482 = vadd.f32 %v370, %v458
        %v483 = vadd.f32 %v371, %v460
        %v484 = vadd.f32 %v372, %v463
        %v485 = vadd.f32 %v373, %v465
        %v486 = vadd.f32 %v374, %v468
        %v487 = vadd.f32 %v375, %v470
        %488 = vst.msk [vmem:[%s299] sm:$0xff] %vm334, %v472
        %489 = vst.msk [vmem:[%s299 + $0x8] sm:$0xff] %vm334, %v473
        %490 = vst.msk [vmem:[%s299 + $0x10] sm:$0xff] %vm334, %v474
        %491 = vst.msk [vmem:[%s299 + $0x18] sm:$0xff] %vm334, %v475
        %492 = vst.msk [vmem:[%s299 + $0x20] sm:$0xff] %vm334, %v476
        %493 = vst.msk [vmem:[%s299 + $0x28] sm:$0xff] %vm334, %v477
        %494 = vst.msk [vmem:[%s299 + $0x30] sm:$0xff] %vm334, %v478
        %495 = vst.msk [vmem:[%s299 + $0x38] sm:$0xff] %vm334, %v479
        %496 = vst.msk [vmem:[%s299 + $0x40] sm:$0xff] %vm334, %v480
        %497 = vst.msk [vmem:[%s299 + $0x48] sm:$0xff] %vm334, %v481
        %498 = vst.msk [vmem:[%s299 + $0x50] sm:$0xff] %vm334, %v482
        %499 = vst.msk [vmem:[%s299 + $0x58] sm:$0xff] %vm334, %v483
        %500 = vst.msk [vmem:[%s299 + $0x60] sm:$0xff] %vm334, %v484
        %501 = vst.msk [vmem:[%s299 + $0x68] sm:$0xff] %vm334, %v485
        %502 = vst.msk [vmem:[%s299 + $0x70] sm:$0xff] %vm334, %v486
        %503 = vst.msk [vmem:[%s299 + $0x78] sm:$0xff] %vm334, %v487
        %v504 = vld [vmem:[%s294] sm:$0x1]
        %v505 = vrot.slane %v359, 4
        %v506 = vadd.f32 %v359, %v505
        %v507 = vrot.slane %v506, 2
        %v508 = vadd.f32 %v506, %v507
        %v509 = vrot.slane %v508, 1
        %v510 = vadd.f32 %v508, %v509
        %v511 = vadd.f32 %v504, %v510
        %512 = vst [vmem:[%s294] sm:$0x1] %v511
        %p513 = scmp.lt.s32.totalorder %s27, 7
        %s514 = scalar_select %p513, %s27, 7
        %s515 = smul.addr %s514, 16
        %s516 = smul.addr %s515, 8
        %s517 = scalar_lea.vmem %s3, %s516
        %s518 = sand.u32 %s146, 1
        %s519 = scalar_lea.sflag [#allocation4], %s518
        %s520 = sand.u32 %s146, 1
        %s521 = scalar_lea.vmem [#allocation8], %s520
        // Predicated region
        $region49: #{tpu_custom_call.1} parent=31 // pred_check
          %p522 = pneg %p130
        $region50: #{tpu_custom_call.1} parent=31 // pred_check_branch
          %524 = sbr.rel (%p522) target = $region52
        $region51: #{tpu_custom_call.1} parent=31 // pred_region
          _
        $region52: #{tpu_custom_call.1} parent=31 // pred_fallthru
          _
        // Predicated region
        $region53: #{tpu_custom_call.1} parent=31 // pred_check
          %p525 = pneg %p156
        $region54: #{tpu_custom_call.1} parent=31 // pred_check_branch
          %527 = sbr.rel (%p525) target = $region56
        $region55: #{tpu_custom_call.1} parent=31 // pred_region
          %529 = vsyncadd %s519, 0
          %s530 = scalar_lea.hbm %s4, %s27
          %s532 = sshll.u32 %s521, 4
          %s533 = int_to_ptr.vmem [resolvable:$true] %s532
          %s534 = sshll.u32 %s530, 4
          %s535 = int_to_ptr.hbm [resolvable:$true] %s534
          %537 = dma.vmem_to_hbm [thread:$0]  %s533, 16, %s535, %s519
        $region56: #{tpu_custom_call.1} parent=31 // pred_fallthru
          _
      $region32: #{tpu_custom_call.1} parent=5 // pred_fallthru
        _
      %p538 = scmp.le.s32.totalorder 2, %s18
      // Predicated region
      $region57: #{tpu_custom_call.1} parent=5 // pred_check
        %p539 = pneg %p538
      $region58: #{tpu_custom_call.1} parent=5 // pred_check_branch
        %541 = sbr.rel (%p539) target = $region60
      $region59: #{tpu_custom_call.1} parent=5 // pred_region
        %s542 = ssub.s32 %s18, 2
        // Predicated region
        $region61: #{tpu_custom_call.1} parent=59 // pred_check
          %p543 = pneg %p136
        $region62: #{tpu_custom_call.1} parent=59 // pred_check_branch
          %545 = sbr.rel (%p543) target = $region64
        $region63: #{tpu_custom_call.1} parent=59 // pred_region
          %p546 = scmp.lt.s32.totalorder %s29, 7
          %s547 = scalar_select %p546, %s29, 7
          %s548 = smul.addr %s547, 16
          %s549 = smul.addr %s548, 8
          %s550 = scalar_lea.vmem %s3, %s549
        $region64: #{tpu_custom_call.1} parent=59 // pred_fallthru
          _
        // Predicated region
        $region65: #{tpu_custom_call.1} parent=59 // pred_check
          %p551 = pneg %p162
        $region66: #{tpu_custom_call.1} parent=59 // pred_check_branch
          %553 = sbr.rel (%p551) target = $region68
        $region67: #{tpu_custom_call.1} parent=59 // pred_region
          %s554 = sand.u32 %s147, 1
          %s555 = scalar_lea.sflag [#allocation4], %s554
          %s556 = sand.u32 %s147, 1
          %s557 = scalar_lea.vmem [#allocation8], %s556
          %559 = dma.done %s555, 16
        $region68: #{tpu_custom_call.1} parent=59 // pred_fallthru
          _
      $region60: #{tpu_custom_call.1} parent=5 // pred_fallthru
        _
    $region6: #{tpu_custom_call.1} parent=1 // loop_footer
      %s22 = sadd.s32 1, %s18
    $region7: #{tpu_custom_call.1} parent=1 // loop_footer_branch
      %17 = sbr.rel target = $region3
    $region8: #{tpu_custom_call.1} parent=1 // loop_exit
      _
    %560 = vsyncpa [#allocation3], 1
    %s561 = scalar_lea.sflag [#allocation3], 1
    %562 = vsyncpa %s561, 1
    %563 = vsyncpa [#allocation6], 1
    %s564 = scalar_lea.sflag [#allocation6], 1
    %565 = vsyncpa %s564, 1
    %566 = vsyncpa [#allocation4], 1
    %s567 = scalar_lea.sflag [#allocation4], 1
    %568 = vsyncpa %s567, 1

</llo_original>
